<compile_context>
chip_gen: v6e
topology: v6e:2x2x1
jax: 0.10.0
libtpu: 0.0.40
codegen_flags: <defaults>
</compile_context>

<pallas_src>
import jax
import jax.numpy as jnp
from jax.experimental import pallas as pl
from jax.experimental.pallas import tpu as pltpu

HIDDEN_DIM = 128
PREFERRED_TILE_B = 1024  # batch rows per grid step (512-2048 per review; multiple of 128)


def critic_kernel(x_ref, w1_ref, b1_ref, w2_ref, b2_ref, w3_ref, b3_ref, o_ref):
    # fc1 + ReLU: cast LHS to the weight dtype so bf16 weights get a single
    # bf16 MXU pass instead of a promoted f32 multi-pass; accumulate in f32.
    h1 = jnp.dot(x_ref[...].astype(w1_ref.dtype), w1_ref[...],
                 preferred_element_type=jnp.float32)
    h1 = jnp.maximum(h1 + b1_ref[...], 0.0)
    # fc2 + ReLU (same bf16-in / f32-accumulate pattern).
    h2 = jnp.dot(h1.astype(w2_ref.dtype), w2_ref[...],
                 preferred_element_type=jnp.float32)
    h2 = jnp.maximum(h2 + b2_ref[...], 0.0)
    # N=1 head on VPU/XLU: transpose + broadcast-mul + sublane reduce gives a
    # lane-dense (1, tile_b) row instead of a masked (tile_b, 1) column store.
    # MXU/XLU have slack here (binding resource is per-step overhead / DMA);
    # re-profile at very large tiles and chunk the transpose per 128 rows only
    # if the vector-extended issue slot ever saturates.
    h2t = h2.T                                        # (HIDDEN_DIM, tile_b)
    w3 = w3_ref[...].astype(jnp.float32)              # (HIDDEN_DIM, 1)
    v = jnp.sum(h2t * w3, axis=0, keepdims=True)      # (1, tile_b)
    o_ref[...] = (v + b3_ref[0]).astype(o_ref.dtype)


def _round_up(x, m):
    return ((x + m - 1) // m) * m


def critic_net_forward(state, params, *, preferred_tile_b=PREFERRED_TILE_B):
    """state: (B, s_dim) -> value: (B, 1) float32."""
    w1, b1, w2, b2, w3, b3 = params
    B, s_dim = state.shape

    # Big tiles to amortize per-step overhead, but never bigger than needed to
    # give >= 2 grid steps (so both v7x TensorCores get work); always a
    # multiple of 128 so the (1, tile_b) output block stays lane-aligned.
    tile_b = min(preferred_tile_b, _round_up(pl.cdiv(B, 2), 128))
    num_tiles = pl.cdiv(B, tile_b)
    b_pad = num_tiles * tile_b

    const = lambda i: (0, 0)  # weights/biases: same block every step -> VMEM-resident

    flops = 2 * B * (s_dim * HIDDEN_DIM + HIDDEN_DIM * HIDDEN_DIM + HIDDEN_DIM)
    bytes_accessed = (state.size * state.dtype.itemsize
                      + sum(p.size * p.dtype.itemsize for p in params)
                      + b_pad * 4)

    out_row = pl.pallas_call(
        critic_kernel,
        out_shape=jax.ShapeDtypeStruct((1, b_pad), jnp.float32),
        grid=(num_tiles,),
        in_specs=[
            pl.BlockSpec((tile_b, s_dim), lambda i: (i, 0)),    # state tile (ragged last tile OK)
            pl.BlockSpec((s_dim, HIDDEN_DIM), const),           # w1
            pl.BlockSpec((1, HIDDEN_DIM), const),               # b1 (f32)
            pl.BlockSpec((HIDDEN_DIM, HIDDEN_DIM), const),      # w2
            pl.BlockSpec((1, HIDDEN_DIM), const),               # b2 (f32)
            pl.BlockSpec((HIDDEN_DIM, 1), const),               # w3
            pl.BlockSpec(memory_space=pltpu.MemorySpace.SMEM),  # b3 scalar
        ],
        out_specs=pl.BlockSpec((1, tile_b), lambda i: (0, i)),  # lane-dense row slab
        compiler_params=pltpu.CompilerParams(
            dimension_semantics=("parallel",)),                  # megacore on v7x
        cost_estimate=pl.CostEstimate(flops=flops, transcendentals=0,
                                      bytes_accessed=bytes_accessed),
    )(state, w1, b1, w2, b2, w3, b3)

    # (1, b_pad) -> (b_pad, 1) is a free row-major reshape; garbage values fed
    # by the ragged last state tile never escape the [:B] slice.
    return out_row.reshape(b_pad, 1)[:B]


def init_params(key, s_dim, a_dim, dtype=jnp.bfloat16):
    # a_dim is stored by the torch module but unused in forward.
    del a_dim
    ks = jax.random.split(key, 6)

    def uni(k, shape, fan_in):
        bound = 1.0 / jnp.sqrt(jnp.float32(fan_in))
        return jax.random.uniform(k, shape, jnp.float32, -bound, bound)

    w1 = uni(ks[0], (s_dim, HIDDEN_DIM), s_dim).astype(dtype)       # (in, out) == torch weight.T
    b1 = uni(ks[1], (1, HIDDEN_DIM), s_dim)                         # biases kept f32
    w2 = uni(ks[2], (HIDDEN_DIM, HIDDEN_DIM), HIDDEN_DIM).astype(dtype)
    b2 = uni(ks[3], (1, HIDDEN_DIM), HIDDEN_DIM)
    w3 = uni(ks[4], (HIDDEN_DIM, 1), HIDDEN_DIM).astype(dtype)
    b3 = uni(ks[5], (1,), HIDDEN_DIM)                               # scalar, lives in SMEM
    return (w1, b1, w2, b2, w3, b3)


def reference_forward(state, params):
    """f32 reference (params/state cast up, highest-precision matmuls)."""
    w1, b1, w2, b2, w3, b3 = params
    hp = jax.lax.Precision.HIGHEST
    x = state.astype(jnp.float32)
    h1 = jnp.maximum(jnp.dot(x, w1.astype(jnp.float32), precision=hp) + b1, 0.0)
    h2 = jnp.maximum(jnp.dot(h1, w2.astype(jnp.float32), precision=hp) + b2, 0.0)
    return jnp.dot(h2, w3.astype(jnp.float32), precision=hp) + b3.reshape(1, 1)


if __name__ == "__main__":
    key = jax.random.PRNGKey(0)
    k_params, k_state = jax.random.split(key)

    s_dim = 32
    a_dim = 4  # kept for signature parity with the torch module (unused in forward)

    # ---- float32 path, single ragged tile (B=8, no wrapper pad) ----
    params_f32 = init_params(k_params, s_dim, a_dim, dtype=jnp.float32)
    state_small = jax.random.normal(k_state, (8, s_dim), dtype=jnp.float32)
    v_small = jax.block_until_ready(critic_net_forward(state_small, params_f32))
    ref_small = reference_forward(state_small, params_f32)
    assert v_small.shape == (8, 1)
    assert jnp.allclose(v_small, ref_small, atol=1e-2, rtol=1e-2)

    # ---- float32 path, multiple grid steps (B=300 -> 2 tiles of 256, parallel axis) ----
    state_big = jax.random.normal(k_state, (300, s_dim), dtype=jnp.float32)
    v_big = jax.block_until_ready(critic_net_forward(state_big, params_f32))
    ref_big = reference_forward(state_big, params_f32)
    assert v_big.shape == (300, 1)
    assert jnp.allclose(v_big, ref_big, atol=1e-2, rtol=1e-2)

    # ---- bf16 weights + bf16 state (default storage), f32 accumulation ----
    params_bf16 = init_params(k_params, s_dim, a_dim)   # bf16 default
    state_bf16 = state_big.astype(jnp.bfloat16)
    v_bf16 = jax.block_until_ready(critic_net_forward(state_bf16, params_bf16))
    ref_bf16 = reference_forward(state_bf16, params_bf16)
    assert v_bf16.shape == (300, 1)
    assert jnp.allclose(v_bf16, ref_bf16, atol=5e-2, rtol=5e-2)

    print("KERNEL_OK")
</pallas_src>

<mosaic_0001>
module attributes {stable_mosaic.version = 11 : i64} {
  func.func @critic_kernel(%arg0: i32, %arg1: memref<128x32xf32, #tpu.memory_space<vmem>>, %arg2: memref<32x128xf32, #tpu.memory_space<vmem>>, %arg3: memref<1x128xf32, #tpu.memory_space<vmem>>, %arg4: memref<128x128xf32, #tpu.memory_space<vmem>>, %arg5: memref<1x128xf32, #tpu.memory_space<vmem>>, %arg6: memref<128x1xf32, #tpu.memory_space<vmem>>, %arg7: memref<1xf32, #tpu.memory_space<smem>>, %arg8: memref<1x128xf32, #tpu.memory_space<vmem>>) attributes {dimension_semantics = [#tpu.dimension_semantics<parallel>], iteration_bounds = array<i64: 1>, scalar_prefetch = 0 : i64, scratch_operands = 0 : i64, tpu.core_type = #tpu.core_type<tc>, window_params = [{transform_indices = @transform_0, window_bounds = array<i64: 128, 32>}, {pipeline_mode = #tpu.pipeline_mode<synchronous>, transform_indices = @transform_1, window_bounds = array<i64: 32, 128>}, {pipeline_mode = #tpu.pipeline_mode<synchronous>, transform_indices = @transform_2, window_bounds = array<i64: 1, 128>}, {pipeline_mode = #tpu.pipeline_mode<synchronous>, transform_indices = @transform_3, window_bounds = array<i64: 128, 128>}, {pipeline_mode = #tpu.pipeline_mode<synchronous>, transform_indices = @transform_4, window_bounds = array<i64: 1, 128>}, {pipeline_mode = #tpu.pipeline_mode<synchronous>, transform_indices = @transform_5, window_bounds = array<i64: 128, 1>}, {transform_indices = @transform_6, window_bounds = array<i64: 1>}, {transform_indices = @transform_7, window_bounds = array<i64: 1, 128>}]} {
    %c0 = arith.constant 0 : index
    %c0_0 = arith.constant 0 : index
    %0 = vector.load %arg1[%c0, %c0_0] : memref<128x32xf32, #tpu.memory_space<vmem>>, vector<128x32xf32>
    %c0_1 = arith.constant 0 : index
    %c0_2 = arith.constant 0 : index
    %1 = vector.load %arg2[%c0_1, %c0_2] : memref<32x128xf32, #tpu.memory_space<vmem>>, vector<32x128xf32>
    %cst = arith.constant dense<0.000000e+00> : vector<128x128xf32>
    %2 = tpu.matmul %0, %1, %cst {dimension_numbers = #tpu.dot_dimension_numbers<[1], [0], [0], [1], [0, 0, 1, 1], [], []>} : vector<128x32xf32>, vector<32x128xf32>, vector<128x128xf32> -> vector<128x128xf32>
    %c0_3 = arith.constant 0 : index
    %c0_4 = arith.constant 0 : index
    %3 = vector.load %arg3[%c0_3, %c0_4] : memref<1x128xf32, #tpu.memory_space<vmem>>, vector<1x128xf32>
    %4 = vector.broadcast %3 : vector<1x128xf32> to vector<128x128xf32>
    %5 = arith.addf %2, %4 : vector<128x128xf32>
    %cst_5 = arith.constant 0.000000e+00 : f32
    %6 = vector.broadcast %cst_5 : f32 to vector<128x128xf32>
    %7 = arith.maximumf %5, %6 : vector<128x128xf32>
    %c0_6 = arith.constant 0 : index
    %c0_7 = arith.constant 0 : index
    %8 = vector.load %arg4[%c0_6, %c0_7] : memref<128x128xf32, #tpu.memory_space<vmem>>, vector<128x128xf32>
    %cst_8 = arith.constant dense<0.000000e+00> : vector<128x128xf32>
    %9 = tpu.matmul %7, %8, %cst_8 {dimension_numbers = #tpu.dot_dimension_numbers<[1], [0], [0], [1], [0, 0, 1, 1], [], []>} : vector<128x128xf32>, vector<128x128xf32>, vector<128x128xf32> -> vector<128x128xf32>
    %c0_9 = arith.constant 0 : index
    %c0_10 = arith.constant 0 : index
    %10 = vector.load %arg5[%c0_9, %c0_10] : memref<1x128xf32, #tpu.memory_space<vmem>>, vector<1x128xf32>
    %11 = vector.broadcast %10 : vector<1x128xf32> to vector<128x128xf32>
    %12 = arith.addf %9, %11 : vector<128x128xf32>
    %cst_11 = arith.constant 0.000000e+00 : f32
    %13 = vector.broadcast %cst_11 : f32 to vector<128x128xf32>
    %14 = arith.maximumf %12, %13 : vector<128x128xf32>
    %15 = tpu.transpose %14, [1, 0] : vector<128x128xf32> -> vector<128x128xf32>
    %c0_12 = arith.constant 0 : index
    %c0_13 = arith.constant 0 : index
    %16 = vector.load %arg6[%c0_12, %c0_13] : memref<128x1xf32, #tpu.memory_space<vmem>>, vector<128x1xf32>
    %17 = vector.broadcast %16 : vector<128x1xf32> to vector<128x128xf32>
    %18 = arith.mulf %15, %17 : vector<128x128xf32>
    %cst_14 = arith.constant dense<0.000000e+00> : vector<128xf32>
    %19 = vector.multi_reduction <add>, %18, %cst_14 [0] : vector<128x128xf32> to vector<128xf32>
    %20 = vector.shape_cast %19 : vector<128xf32> to vector<1x128xf32>
    %c0_15 = arith.constant 0 : index
    %21 = memref.load %arg7[%c0_15] : memref<1xf32, #tpu.memory_space<smem>>
    %22 = vector.broadcast %21 : f32 to vector<1x128xf32>
    %23 = arith.addf %20, %22 : vector<1x128xf32>
    %c0_16 = arith.constant 0 : index
    %c0_17 = arith.constant 0 : index
    %24 = vector.load %arg8[%c0_16, %c0_17] : memref<1x128xf32, #tpu.memory_space<vmem>>, vector<1x128xf32>
    tpu.vector_store %arg8[%c0_16, %c0_17], %23 {strides = array<i32>} : memref<1x128xf32, #tpu.memory_space<vmem>>, vector<1x128xf32>,
    return
  }
  func.func @transform_0(%arg0: i32) -> (i32, i32) {
    %c0_i32 = arith.constant 0 : i32
    %c0_i32_0 = arith.constant 0 : i32
    return %arg0, %c0_i32 : i32, i32
  }
  func.func @transform_1(%arg0: i32) -> (i32, i32) {
    %c0_i32 = arith.constant 0 : i32
    %c0_i32_0 = arith.constant 0 : i32
    %c0_i32_1 = arith.constant 0 : i32
    return %c0_i32, %c0_i32_0 : i32, i32
  }
  func.func @transform_2(%arg0: i32) -> (i32, i32) {
    %c0_i32 = arith.constant 0 : i32
    %c0_i32_0 = arith.constant 0 : i32
    %c0_i32_1 = arith.constant 0 : i32
    return %c0_i32, %c0_i32_0 : i32, i32
  }
  func.func @transform_3(%arg0: i32) -> (i32, i32) {
    %c0_i32 = arith.constant 0 : i32
    %c0_i32_0 = arith.constant 0 : i32
    %c0_i32_1 = arith.constant 0 : i32
    return %c0_i32, %c0_i32_0 : i32, i32
  }
  func.func @transform_4(%arg0: i32) -> (i32, i32) {
    %c0_i32 = arith.constant 0 : i32
    %c0_i32_0 = arith.constant 0 : i32
    %c0_i32_1 = arith.constant 0 : i32
    return %c0_i32, %c0_i32_0 : i32, i32
  }
  func.func @transform_5(%arg0: i32) -> (i32, i32) {
    %c0_i32 = arith.constant 0 : i32
    %c0_i32_0 = arith.constant 0 : i32
    %c0_i32_1 = arith.constant 0 : i32
    return %c0_i32, %c0_i32_0 : i32, i32
  }
  func.func @transform_6(%arg0: i32) -> i32 {
    %c0_i32 = arith.constant 0 : i32
    %c0_i32_0 = arith.constant 0 : i32
    return %c0_i32 : i32
  }
  func.func @transform_7(%arg0: i32) -> (i32, i32) {
    %c0_i32 = arith.constant 0 : i32
    %c0_i32_0 = arith.constant 0 : i32
    return %c0_i32, %arg0 : i32, i32
  }
}

</mosaic_0001>

<llo_original>
// kernel: tpu_custom_call.1
$region0: #{tpu_custom_call.1}
  #allocation0 [shape = 'u32[]', space=smem, size = 0x4, offset = 0x4, fixed_abs, tag = 'smem constant byte address 0x4 - core index']
  #allocation1 [shape = 'u32[144,128]{1,0:T(1,128)}', space=vmem, size = 0x12000, scoped, tag = 'internal scratch']
  #allocation2 [shape = 'f32[1]{0:T(128)S(6)}', space=smem, size = 0x200, scoped, tag = 'scoped memory for tpu_custom_call.1']
  %s0 = inlined_call_operand.vmem [shape: f32[8,32], index: 0, kind: input, shape index: {}]
  %s1 = inlined_call_operand.hbm [shape: f32[32,128], index: 1, kind: input, shape index: {}]
  %s2 = inlined_call_operand.hbm [shape: f32[1,128], index: 2, kind: input, shape index: {}]
  %s3 = inlined_call_operand.vmem [shape: f32[128,128], index: 3, kind: input, shape index: {}]
  %s4 = inlined_call_operand.vmem [shape: f32[1,128], index: 4, kind: input, shape index: {}]
  %s5 = inlined_call_operand.vmem [shape: f32[128,1], index: 5, kind: input, shape index: {}]
  %s6 = inlined_call_operand.<no memory space> [shape: f32[1], index: 6, kind: input, shape index: {}]
  %s7 = inlined_call_operand.hbm [shape: f32[1,128], index: 7, kind: output, shape index: {}]
  %s8 = sld [smem:[#allocation0]]
  $region46: #{tpu_custom_call.1} parent=0
    _
  %s10 = ssub.s32 1, %s8
  %s11 = scalar_select 0, %s10, %s8
  %12 = sst [smem:[#allocation2]] %s6
  $region1: #{tpu_custom_call.1} parent=0
    #allocation3 [shape = 'u8[16384]{0}', space=vmem, size = 0x4000, scoped, tag = 'input window, operand 1, single buffered']
    #allocation4 [shape = 's32[1]{0}', space=sflag, size = 0x4, scoped, tag = 'scoped memory for tpu_custom_call.1']
    #allocation5 [shape = 's32[1]{0}', space=sflag, size = 0x4, scoped, tag = 'scoped memory for tpu_custom_call.1']
    #allocation6 [shape = 'u8[512]{0}', space=vmem, size = 0x400, scoped, tag = 'input window, operand 2, single buffered']
    #allocation7 [shape = 's32[1]{0}', space=sflag, size = 0x4, scoped, tag = 'scoped memory for tpu_custom_call.1']
    #allocation8 [shape = 'u8[512]{0}', space=vmem, size = 0x400, scoped, tag = 'output window, operand 0, single buffered']
    %13 = vsyncpa [#allocation4], 0
    %14 = vsyncpa [#allocation7], 0
    %15 = vsyncpa [#allocation5], 0
    // Predicated region
    $region2: #{tpu_custom_call.1} parent=1 // pred_check
      _
    $region3: #{tpu_custom_call.1} parent=1 // pred_check_branch
      %17 = sbr.rel (0) target = $region5
    $region4: #{tpu_custom_call.1} parent=1 // pred_region
      _
    $region5: #{tpu_custom_call.1} parent=1 // pred_fallthru
      _
    // Predicated region
    $region6: #{tpu_custom_call.1} parent=1 // pred_check
      _
    $region7: #{tpu_custom_call.1} parent=1 // pred_check_branch
      %19 = sbr.rel (0) target = $region9
    $region8: #{tpu_custom_call.1} parent=1 // pred_region
      %s21 = ssub.s32 512, 512
      %22 = vsyncadd [#allocation4], %s21
      %s23 = sshll.u32 [#allocation3], 4
      %s24 = int_to_ptr.vmem [resolvable:$true] %s23
      %29 = dma.hbm_to_vmem [thread:$0]  %s1, 512, %s24, [#allocation4], 128, 128, 8
    $region9: #{tpu_custom_call.1} parent=1 // pred_fallthru
      _
    // Predicated region
    $region10: #{tpu_custom_call.1} parent=1 // pred_check
      _
    $region11: #{tpu_custom_call.1} parent=1 // pred_check_branch
      %31 = sbr.rel (0) target = $region13
    $region12: #{tpu_custom_call.1} parent=1 // pred_region
      %s33 = ssub.s32 16, 16
      %34 = vsyncadd [#allocation7], %s33
      %s36 = sshll.u32 [#allocation6], 4
      %s37 = int_to_ptr.vmem [resolvable:$true] %s36
      %39 = dma.hbm_to_vmem [thread:$0]  %s2, 16, %s37, [#allocation7]
    $region13: #{tpu_custom_call.1} parent=1 // pred_fallthru
      _
    // Predicated region
    $region14: #{tpu_custom_call.1} parent=1 // pred_check
      _
    $region15: #{tpu_custom_call.1} parent=1 // pred_check_branch
      %41 = sbr.rel (0) target = $region17
    $region16: #{tpu_custom_call.1} parent=1 // pred_region
      _
    $region17: #{tpu_custom_call.1} parent=1 // pred_fallthru
      _
    // Predicated region
    $region18: #{tpu_custom_call.1} parent=1 // pred_check
      _
    $region19: #{tpu_custom_call.1} parent=1 // pred_check_branch
      %43 = sbr.rel (0) target = $region21
    $region20: #{tpu_custom_call.1} parent=1 // pred_region
      _
    $region21: #{tpu_custom_call.1} parent=1 // pred_fallthru
      _
    // Predicated region
    $region22: #{tpu_custom_call.1} parent=1 // pred_check
      _
    $region23: #{tpu_custom_call.1} parent=1 // pred_check_branch
      %45 = sbr.rel (0) target = $region25
    $region24: #{tpu_custom_call.1} parent=1 // pred_region
      _
    $region25: #{tpu_custom_call.1} parent=1 // pred_fallthru
      _
    // Predicated region
    $region26: #{tpu_custom_call.1} parent=1 // pred_check
      _
    $region27: #{tpu_custom_call.1} parent=1 // pred_check_branch
      %47 = sbr.rel (0) target = $region29
    $region28: #{tpu_custom_call.1} parent=1 // pred_region
      _
    $region29: #{tpu_custom_call.1} parent=1 // pred_fallthru
      _
    // Predicated region
    $region30: #{tpu_custom_call.1} parent=1 // pred_check
      _
    $region31: #{tpu_custom_call.1} parent=1 // pred_check_branch
      %49 = sbr.rel (0) target = $region33
    $region32: #{tpu_custom_call.1} parent=1 // pred_region
      %50 = dma.done [#allocation4], 512
    $region33: #{tpu_custom_call.1} parent=1 // pred_fallthru
      _
    // Predicated region
    $region34: #{tpu_custom_call.1} parent=1 // pred_check
      _
    $region35: #{tpu_custom_call.1} parent=1 // pred_check_branch
      %52 = sbr.rel (0) target = $region37
    $region36: #{tpu_custom_call.1} parent=1 // pred_region
      %53 = dma.done [#allocation7], 16
    $region37: #{tpu_custom_call.1} parent=1 // pred_fallthru
      _
    %v54 = vld [vmem:[%s0] sm:$0xff]
    %v55 = vld [vmem:[%s0 + $0x8] sm:$0xff]
    %v56 = vld [vmem:[%s0 + $0x10] sm:$0xff]
    %v57 = vld [vmem:[%s0 + $0x18] sm:$0xff]
    %v58 = vld [vmem:[%s0 + $0x20] sm:$0xff]
    %v59 = vld [vmem:[%s0 + $0x28] sm:$0xff]
    %v60 = vld [vmem:[%s0 + $0x30] sm:$0xff]
    %v61 = vld [vmem:[%s0 + $0x38] sm:$0xff]
    %v62 = vld [vmem:[%s0 + $0x40] sm:$0xff]
    %v63 = vld [vmem:[%s0 + $0x48] sm:$0xff]
    %v64 = vld [vmem:[%s0 + $0x50] sm:$0xff]
    %v65 = vld [vmem:[%s0 + $0x58] sm:$0xff]
    %v66 = vld [vmem:[%s0 + $0x60] sm:$0xff]
    %v67 = vld [vmem:[%s0 + $0x68] sm:$0xff]
    %v68 = vld [vmem:[%s0 + $0x70] sm:$0xff]
    %v69 = vld [vmem:[%s0 + $0x78] sm:$0xff]
    %v70 = vld [vmem:[#allocation3] sm:$0xff]
    %v71 = vld [vmem:[#allocation3 + $0x8] sm:$0xff]
    %v72 = vld [vmem:[#allocation3 + $0x10] sm:$0xff]
    %v73 = vld [vmem:[#allocation3 + $0x18] sm:$0xff]
    %v74 = vld [vmem:[#allocation6] sm:$0x1]
    %v76 = vlaneseq
    %v77 = vshrl.u32 %v76, 7
    %v78 = vsub.s32 0, %v77
    %v79 = vrot.slane %v74, %v78
    %vm81 = vcmask 261120
    %v83 = vsel %vm81, %v54, 0
    %v86 = vsel %vm81, %v55, 0
    %v89 = vsel %vm81, %v56, 0
    %v92 = vsel %vm81, %v57, 0
    %v95 = vsel %vm81, %v58, 0
    %v98 = vsel %vm81, %v59, 0
    %v101 = vsel %vm81, %v60, 0
    %v104 = vsel %vm81, %v61, 0
    %v107 = vsel %vm81, %v62, 0
    %v110 = vsel %vm81, %v63, 0
    %v113 = vsel %vm81, %v64, 0
    %v116 = vsel %vm81, %v65, 0
    %v119 = vsel %vm81, %v66, 0
    %v122 = vsel %vm81, %v67, 0
    %v125 = vsel %vm81, %v68, 0
    %v128 = vsel %vm81, %v69, 0
    %130 = vmatprep.subr.mxu0 0.0
    %131 = vmatpush1.msra.mxu0 0.0
    %132 = vmatprep.subr.mxu0 0.0
    %133 = vmatpush1.msra.mxu0 0.0
    %134 = vmatprep.subr.mxu0 0.0
    %135 = vmatpush1.msra.mxu0 0.0
    %136 = vmatprep.subr.mxu0 0.0
    %137 = vmatpush1.msra.mxu0 0.0
    %138 = vmatprep.subr.mxu0 0.0
    %139 = vmatpush1.msra.mxu0 0.0
    %140 = vmatprep.subr.mxu0 0.0
    %141 = vmatpush1.msra.mxu0 0.0
    %142 = vmatprep.subr.mxu0 0.0
    %143 = vmatpush1.msra.mxu0 0.0
    %144 = vmatprep.subr.mxu0 0.0
    %145 = vmatpush1.msra.mxu0 0.0
    %146 = vmatprep.subr.mxu0 0.0
    %147 = vmatpush1.msra.mxu0 0.0
    %148 = vmatprep.subr.mxu0 0.0
    %149 = vmatpush1.msra.mxu0 0.0
    %150 = vmatprep.subr.mxu0 0.0
    %151 = vmatpush1.msra.mxu0 0.0
    %152 = vmatprep.subr.mxu0 0.0
    %153 = vmatpush1.msra.mxu0 0.0
    %154 = vmatprep.subr.mxu0 0.0
    %155 = vmatpush1.msra.mxu0 %v73
    %156 = vmatprep.subr.mxu0 0.0
    %157 = vmatpush1.msra.mxu0 %v72
    %158 = vmatprep.subr.mxu0 0.0
    %159 = vmatpush1.msra.mxu0 %v71
    %160 = vmatprep.subr.mxu0 0.0
    %161 = vmatpush1.msra.mxu0 %v70
    %162 = vmatprep.subr.mxu0 0.0
    %163 = vmatpush2.msra.mxu0 0.0
    %164 = vmatprep.subr.mxu0 0.0
    %165 = vmatpush2.msra.mxu0 0.0
    %166 = vmatprep.subr.mxu0 0.0
    %167 = vmatpush2.msra.mxu0 0.0
    %168 = vmatprep.subr.mxu0 0.0
    %169 = vmatpush2.msra.mxu0 0.0
    %170 = vmatprep.subr.mxu0 0.0
    %171 = vmatpush2.msra.mxu0 0.0
    %172 = vmatprep.subr.mxu0 0.0
    %173 = vmatpush2.msra.mxu0 0.0
    %174 = vmatprep.subr.mxu0 0.0
    %175 = vmatpush2.msra.mxu0 0.0
    %176 = vmatprep.subr.mxu0 0.0
    %177 = vmatpush2.msra.mxu0 0.0
    %178 = vmatprep.subr.mxu0 0.0
    %179 = vmatpush2.msra.mxu0 0.0
    %180 = vmatprep.subr.mxu0 0.0
    %181 = vmatpush2.msra.mxu0 0.0
    %182 = vmatprep.subr.mxu0 0.0
    %183 = vmatpush2.msra.mxu0 0.0
    %184 = vmatprep.subr.mxu0 0.0
    %185 = vmatpush2.msra.mxu0 0.0
    %186 = vmatprep.subr.mxu0 0.0
    %187 = vmatpush2.msra.mxu0 0.0
    %188 = vmatprep.subr.mxu0 0.0
    %189 = vmatpush2.msra.mxu0 0.0
    %190 = vmatprep.subr.mxu0 0.0
    %191 = vmatpush2.msra.mxu0 0.0
    %192 = vmatprep.subr.mxu0 0.0
    %193 = vmatpush2.msra.mxu0 0.0
    %194 = vmatprep.mubr.f32.mxu0 0.0
    %195 = vmatmul.mubr.f32.gmra.mxu0 %v83
    %v196 = vpop.f32.mrf.mxu0
    %v197 = vadd.f32 %v79, %v196
    %v198 = vpop.f32.mrf.mxu0
    %199 = vmatprep.mubr.f32.mxu0 0.0
    %200 = vmatmul.mubr.f32.gmra.mxu0 %v86
    %v201 = vpop.f32.mrf.mxu0
    %v202 = vadd.f32 %v79, %v201
    %v203 = vpop.f32.mrf.mxu0
    %204 = vmatprep.mubr.f32.mxu0 0.0
    %205 = vmatmul.mubr.f32.gmra.mxu0 %v89
    %v206 = vpop.f32.mrf.mxu0
    %v207 = vadd.f32 %v79, %v206
    %v208 = vpop.f32.mrf.mxu0
    %209 = vmatprep.mubr.f32.mxu0 0.0
    %210 = vmatmul.mubr.f32.gmra.mxu0 %v92
    %v211 = vpop.f32.mrf.mxu0
    %v212 = vadd.f32 %v79, %v211
    %v213 = vpop.f32.mrf.mxu0
    %214 = vmatprep.mubr.f32.mxu0 0.0
    %215 = vmatmul.mubr.f32.gmra.mxu0 %v95
    %v216 = vpop.f32.mrf.mxu0
    %v217 = vadd.f32 %v79, %v216
    %v218 = vpop.f32.mrf.mxu0
    %219 = vmatprep.mubr.f32.mxu0 0.0
    %220 = vmatmul.mubr.f32.gmra.mxu0 %v98
    %v221 = vpop.f32.mrf.mxu0
    %v222 = vadd.f32 %v79, %v221
    %v223 = vpop.f32.mrf.mxu0
    %224 = vmatprep.mubr.f32.mxu0 0.0
    %225 = vmatmul.mubr.f32.gmra.mxu0 %v101
    %v226 = vpop.f32.mrf.mxu0
    %v227 = vadd.f32 %v79, %v226
    %v228 = vpop.f32.mrf.mxu0
    %229 = vmatprep.mubr.f32.mxu0 0.0
    %230 = vmatmul.mubr.f32.gmra.mxu0 %v104
    %v231 = vpop.f32.mrf.mxu0
    %v232 = vadd.f32 %v79, %v231
    %v233 = vpop.f32.mrf.mxu0
    %234 = vmatprep.mubr.f32.mxu0 0.0
    %235 = vmatmul.mubr.f32.gmra.mxu0 %v107
    %v236 = vpop.f32.mrf.mxu0
    %v237 = vadd.f32 %v79, %v236
    %v238 = vpop.f32.mrf.mxu0
    %239 = vmatprep.mubr.f32.mxu0 0.0
    %240 = vmatmul.mubr.f32.gmra.mxu0 %v110
    %v241 = vpop.f32.mrf.mxu0
    %v242 = vadd.f32 %v79, %v241
    %v243 = vpop.f32.mrf.mxu0
    %244 = vmatprep.mubr.f32.mxu0 0.0
    %245 = vmatmul.mubr.f32.gmra.mxu0 %v113
    %v246 = vpop.f32.mrf.mxu0
    %v247 = vadd.f32 %v79, %v246
    %v248 = vpop.f32.mrf.mxu0
    %249 = vmatprep.mubr.f32.mxu0 0.0
    %250 = vmatmul.mubr.f32.gmra.mxu0 %v116
    %v251 = vpop.f32.mrf.mxu0
    %v252 = vadd.f32 %v79, %v251
    %v253 = vpop.f32.mrf.mxu0
    %254 = vmatprep.mubr.f32.mxu0 0.0
    %255 = vmatmul.mubr.f32.gmra.mxu0 %v119
    %v256 = vpop.f32.mrf.mxu0
    %v257 = vadd.f32 %v79, %v256
    %v258 = vpop.f32.mrf.mxu0
    %259 = vmatprep.mubr.f32.mxu0 0.0
    %260 = vmatmul.mubr.f32.gmra.mxu0 %v122
    %v261 = vpop.f32.mrf.mxu0
    %v262 = vadd.f32 %v79, %v261
    %v263 = vpop.f32.mrf.mxu0
    %264 = vmatprep.mubr.f32.mxu0 0.0
    %265 = vmatmul.mubr.f32.gmra.mxu0 %v125
    %v266 = vpop.f32.mrf.mxu0
    %v267 = vadd.f32 %v79, %v266
    %v268 = vpop.f32.mrf.mxu0
    %269 = vmatprep.mubr.f32.mxu0 0.0
    %270 = vmatmul.mubr.f32.gmra.mxu0 %v128
    %v271 = vpop.f32.mrf.mxu0
    %v272 = vadd.f32 %v79, %v271
    %v273 = vpop.f32.mrf.mxu0
    %274 = vdwg.mxu0
    %v275 = vmax.f32 %v197, 0.0
    %v276 = vmax.f32 %v202, 0.0
    %v277 = vmax.f32 %v207, 0.0
    %v278 = vmax.f32 %v212, 0.0
    %v279 = vmax.f32 %v217, 0.0
    %v280 = vmax.f32 %v222, 0.0
    %v281 = vmax.f32 %v227, 0.0
    %v282 = vmax.f32 %v232, 0.0
    %v283 = vmax.f32 %v237, 0.0
    %v284 = vmax.f32 %v242, 0.0
    %v285 = vmax.f32 %v247, 0.0
    %v286 = vmax.f32 %v252, 0.0
    %v287 = vmax.f32 %v257, 0.0
    %v288 = vmax.f32 %v262, 0.0
    %v289 = vmax.f32 %v267, 0.0
    %v290 = vmax.f32 %v272, 0.0
    %v291 = vld [vmem:[%s3] sm:$0xff]
    %v292 = vld [vmem:[%s3 + $0x8] sm:$0xff]
    %v293 = vld [vmem:[%s3 + $0x10] sm:$0xff]
    %v294 = vld [vmem:[%s3 + $0x18] sm:$0xff]
    %v295 = vld [vmem:[%s3 + $0x20] sm:$0xff]
    %v296 = vld [vmem:[%s3 + $0x28] sm:$0xff]
    %v297 = vld [vmem:[%s3 + $0x30] sm:$0xff]
    %v298 = vld [vmem:[%s3 + $0x38] sm:$0xff]
    %v299 = vld [vmem:[%s3 + $0x40] sm:$0xff]
    %v300 = vld [vmem:[%s3 + $0x48] sm:$0xff]
    %v301 = vld [vmem:[%s3 + $0x50] sm:$0xff]
    %v302 = vld [vmem:[%s3 + $0x58] sm:$0xff]
    %v303 = vld [vmem:[%s3 + $0x60] sm:$0xff]
    %v304 = vld [vmem:[%s3 + $0x68] sm:$0xff]
    %v305 = vld [vmem:[%s3 + $0x70] sm:$0xff]
    %v306 = vld [vmem:[%s3 + $0x78] sm:$0xff]
    %v307 = vld [vmem:[%s4] sm:$0x1]
    %v309 = vlaneseq
    %v310 = vshrl.u32 %v309, 7
    %v311 = vsub.s32 0, %v310
    %v312 = vrot.slane %v307, %v311
    %314 = vmatprep.subr.mxu0 0.0
    %315 = vmatpush1.msra.mxu0 %v306
    %316 = vmatprep.subr.mxu0 0.0
    %317 = vmatpush1.msra.mxu0 %v305
    %318 = vmatprep.subr.mxu0 0.0
    %319 = vmatpush1.msra.mxu0 %v304
    %320 = vmatprep.subr.mxu0 0.0
    %321 = vmatpush1.msra.mxu0 %v303
    %322 = vmatprep.subr.mxu0 0.0
    %323 = vmatpush1.msra.mxu0 %v302
    %324 = vmatprep.subr.mxu0 0.0
    %325 = vmatpush1.msra.mxu0 %v301
    %326 = vmatprep.subr.mxu0 0.0
    %327 = vmatpush1.msra.mxu0 %v300
    %328 = vmatprep.subr.mxu0 0.0
    %329 = vmatpush1.msra.mxu0 %v299
    %330 = vmatprep.subr.mxu0 0.0
    %331 = vmatpush1.msra.mxu0 %v298
    %332 = vmatprep.subr.mxu0 0.0
    %333 = vmatpush1.msra.mxu0 %v297
    %334 = vmatprep.subr.mxu0 0.0
    %335 = vmatpush1.msra.mxu0 %v296
    %336 = vmatprep.subr.mxu0 0.0
    %337 = vmatpush1.msra.mxu0 %v295
    %338 = vmatprep.subr.mxu0 0.0
    %339 = vmatpush1.msra.mxu0 %v294
    %340 = vmatprep.subr.mxu0 0.0
    %341 = vmatpush1.msra.mxu0 %v293
    %342 = vmatprep.subr.mxu0 0.0
    %343 = vmatpush1.msra.mxu0 %v292
    %344 = vmatprep.subr.mxu0 0.0
    %345 = vmatpush1.msra.mxu0 %v291
    %346 = vmatprep.subr.mxu0 0.0
    %347 = vmatpush2.msra.mxu0 0.0
    %348 = vmatprep.subr.mxu0 0.0
    %349 = vmatpush2.msra.mxu0 0.0
    %350 = vmatprep.subr.mxu0 0.0
    %351 = vmatpush2.msra.mxu0 0.0
    %352 = vmatprep.subr.mxu0 0.0
    %353 = vmatpush2.msra.mxu0 0.0
    %354 = vmatprep.subr.mxu0 0.0
    %355 = vmatpush2.msra.mxu0 0.0
    %356 = vmatprep.subr.mxu0 0.0
    %357 = vmatpush2.msra.mxu0 0.0
    %358 = vmatprep.subr.mxu0 0.0
    %359 = vmatpush2.msra.mxu0 0.0
    %360 = vmatprep.subr.mxu0 0.0
    %361 = vmatpush2.msra.mxu0 0.0
    %362 = vmatprep.subr.mxu0 0.0
    %363 = vmatpush2.msra.mxu0 0.0
    %364 = vmatprep.subr.mxu0 0.0
    %365 = vmatpush2.msra.mxu0 0.0
    %366 = vmatprep.subr.mxu0 0.0
    %367 = vmatpush2.msra.mxu0 0.0
    %368 = vmatprep.subr.mxu0 0.0
    %369 = vmatpush2.msra.mxu0 0.0
    %370 = vmatprep.subr.mxu0 0.0
    %371 = vmatpush2.msra.mxu0 0.0
    %372 = vmatprep.subr.mxu0 0.0
    %373 = vmatpush2.msra.mxu0 0.0
    %374 = vmatprep.subr.mxu0 0.0
    %375 = vmatpush2.msra.mxu0 0.0
    %376 = vmatprep.subr.mxu0 0.0
    %377 = vmatpush2.msra.mxu0 0.0
    %378 = vmatprep.mubr.f32.mxu0 0.0
    %379 = vmatmul.mubr.f32.gmra.mxu0 %v275
    %v380 = vpop.f32.mrf.mxu0
    %v381 = vadd.f32 %v312, %v380
    %v382 = vpop.f32.mrf.mxu0
    %383 = vmatprep.mubr.f32.mxu0 0.0
    %384 = vmatmul.mubr.f32.gmra.mxu0 %v276
    %v385 = vpop.f32.mrf.mxu0
    %v386 = vadd.f32 %v312, %v385
    %v387 = vpop.f32.mrf.mxu0
    %388 = vmatprep.mubr.f32.mxu0 0.0
    %389 = vmatmul.mubr.f32.gmra.mxu0 %v277
    %v390 = vpop.f32.mrf.mxu0
    %v391 = vadd.f32 %v312, %v390
    %v392 = vpop.f32.mrf.mxu0
    %393 = vmatprep.mubr.f32.mxu0 0.0
    %394 = vmatmul.mubr.f32.gmra.mxu0 %v278
    %v395 = vpop.f32.mrf.mxu0
    %v396 = vadd.f32 %v312, %v395
    %v397 = vpop.f32.mrf.mxu0
    %398 = vmatprep.mubr.f32.mxu0 0.0
    %399 = vmatmul.mubr.f32.gmra.mxu0 %v279
    %v400 = vpop.f32.mrf.mxu0
    %v401 = vadd.f32 %v312, %v400
    %v402 = vpop.f32.mrf.mxu0
    %403 = vmatprep.mubr.f32.mxu0 0.0
    %404 = vmatmul.mubr.f32.gmra.mxu0 %v280
    %v405 = vpop.f32.mrf.mxu0
    %v406 = vadd.f32 %v312, %v405
    %v407 = vpop.f32.mrf.mxu0
    %408 = vmatprep.mubr.f32.mxu0 0.0
    %409 = vmatmul.mubr.f32.gmra.mxu0 %v281
    %v410 = vpop.f32.mrf.mxu0
    %v411 = vadd.f32 %v312, %v410
    %v412 = vpop.f32.mrf.mxu0
    %413 = vmatprep.mubr.f32.mxu0 0.0
    %414 = vmatmul.mubr.f32.gmra.mxu0 %v282
    %v415 = vpop.f32.mrf.mxu0
    %v416 = vadd.f32 %v312, %v415
    %v417 = vpop.f32.mrf.mxu0
    %418 = vmatprep.mubr.f32.mxu0 0.0
    %419 = vmatmul.mubr.f32.gmra.mxu0 %v283
    %v420 = vpop.f32.mrf.mxu0
    %v421 = vadd.f32 %v312, %v420
    %v422 = vpop.f32.mrf.mxu0
    %423 = vmatprep.mubr.f32.mxu0 0.0
    %424 = vmatmul.mubr.f32.gmra.mxu0 %v284
    %v425 = vpop.f32.mrf.mxu0
    %v426 = vadd.f32 %v312, %v425
    %v427 = vpop.f32.mrf.mxu0
    %428 = vmatprep.mubr.f32.mxu0 0.0
    %429 = vmatmul.mubr.f32.gmra.mxu0 %v285
    %v430 = vpop.f32.mrf.mxu0
    %v431 = vadd.f32 %v312, %v430
    %v432 = vpop.f32.mrf.mxu0
    %433 = vmatprep.mubr.f32.mxu0 0.0
    %434 = vmatmul.mubr.f32.gmra.mxu0 %v286
    %v435 = vpop.f32.mrf.mxu0
    %v436 = vadd.f32 %v312, %v435
    %v437 = vpop.f32.mrf.mxu0
    %438 = vmatprep.mubr.f32.mxu0 0.0
    %439 = vmatmul.mubr.f32.gmra.mxu0 %v287
    %v440 = vpop.f32.mrf.mxu0
    %v441 = vadd.f32 %v312, %v440
    %v442 = vpop.f32.mrf.mxu0
    %443 = vmatprep.mubr.f32.mxu0 0.0
    %444 = vmatmul.mubr.f32.gmra.mxu0 %v288
    %v445 = vpop.f32.mrf.mxu0
    %v446 = vadd.f32 %v312, %v445
    %v447 = vpop.f32.mrf.mxu0
    %448 = vmatprep.mubr.f32.mxu0 0.0
    %449 = vmatmul.mubr.f32.gmra.mxu0 %v289
    %v450 = vpop.f32.mrf.mxu0
    %v451 = vadd.f32 %v312, %v450
    %v452 = vpop.f32.mrf.mxu0
    %453 = vmatprep.mubr.f32.mxu0 0.0
    %454 = vmatmul.mubr.f32.gmra.mxu0 %v290
    %v455 = vpop.f32.mrf.mxu0
    %v456 = vadd.f32 %v312, %v455
    %v457 = vpop.f32.mrf.mxu0
    %458 = vdwg.mxu0
    %v459 = vmax.f32 %v381, 0.0
    %v460 = vmax.f32 %v386, 0.0
    %v461 = vmax.f32 %v391, 0.0
    %v462 = vmax.f32 %v396, 0.0
    %v463 = vmax.f32 %v401, 0.0
    %v464 = vmax.f32 %v406, 0.0
    %v465 = vmax.f32 %v411, 0.0
    %v466 = vmax.f32 %v416, 0.0
    %v467 = vmax.f32 %v421, 0.0
    %v468 = vmax.f32 %v426, 0.0
    %v469 = vmax.f32 %v431, 0.0
    %v470 = vmax.f32 %v436, 0.0
    %v471 = vmax.f32 %v441, 0.0
    %v472 = vmax.f32 %v446, 0.0
    %v473 = vmax.f32 %v451, 0.0
    %v474 = vmax.f32 %v456, 0.0
    %475 = vxpose.xlu0.b32.start [1/16] %v459, 128
    %476 = vxpose.xlu0.b32.cont [2/16] %v460, 128
    %477 = vxpose.xlu0.b32.cont [3/16] %v461, 128
    %478 = vxpose.xlu0.b32.cont [4/16] %v462, 128
    %479 = vxpose.xlu0.b32.cont [5/16] %v463, 128
    %480 = vxpose.xlu0.b32.cont [6/16] %v464, 128
    %481 = vxpose.xlu0.b32.cont [7/16] %v465, 128
    %482 = vxpose.xlu0.b32.cont [8/16] %v466, 128
    %483 = vxpose.xlu0.b32.cont [9/16] %v467, 128
    %484 = vxpose.xlu0.b32.cont [10/16] %v468, 128
    %485 = vxpose.xlu0.b32.cont [11/16] %v469, 128
    %486 = vxpose.xlu0.b32.cont [12/16] %v470, 128
    %487 = vxpose.xlu0.b32.cont [13/16] %v471, 128
    %488 = vxpose.xlu0.b32.cont [14/16] %v472, 128
    %489 = vxpose.xlu0.b32.cont [15/16] %v473, 128
    %490 = vxpose.xlu0.b32.end [16/16] %v474, 128
    %v491 = vpop.trf.xlu0
    %v492 = vpop.trf.xlu0
    %v493 = vpop.trf.xlu0
    %v494 = vpop.trf.xlu0
    %v495 = vpop.trf.xlu0
    %v496 = vpop.trf.xlu0
    %v497 = vpop.trf.xlu0
    %v498 = vpop.trf.xlu0
    %v499 = vpop.trf.xlu0
    %v500 = vpop.trf.xlu0
    %v501 = vpop.trf.xlu0
    %v502 = vpop.trf.xlu0
    %v503 = vpop.trf.xlu0
    %v504 = vpop.trf.xlu0
    %v505 = vpop.trf.xlu0
    %v506 = vpop.trf.xlu0
    %v507 = vld [vmem:[%s5] sm:$0xff]
    %v508 = vld [vmem:[%s5 + $0x8] sm:$0xff]
    %v509 = vld [vmem:[%s5 + $0x10] sm:$0xff]
    %v510 = vld [vmem:[%s5 + $0x18] sm:$0xff]
    %v511 = vld [vmem:[%s5 + $0x20] sm:$0xff]
    %v512 = vld [vmem:[%s5 + $0x28] sm:$0xff]
    %v513 = vld [vmem:[%s5 + $0x30] sm:$0xff]
    %v514 = vld [vmem:[%s5 + $0x38] sm:$0xff]
    %v515 = vld [vmem:[%s5 + $0x40] sm:$0xff]
    %v516 = vld [vmem:[%s5 + $0x48] sm:$0xff]
    %v517 = vld [vmem:[%s5 + $0x50] sm:$0xff]
    %v518 = vld [vmem:[%s5 + $0x58] sm:$0xff]
    %v519 = vld [vmem:[%s5 + $0x60] sm:$0xff]
    %v520 = vld [vmem:[%s5 + $0x68] sm:$0xff]
    %v521 = vld [vmem:[%s5 + $0x70] sm:$0xff]
    %v522 = vld [vmem:[%s5 + $0x78] sm:$0xff]
    %524 = vset.pattern.permute.xlu0 0
    %525 = vperm.xlu0 %524, %v507
    %v526 = vpop.permute.xlu0 %525
    %529 = vset.pattern.permute.xlu0 0
    %530 = vperm.xlu0 %529, %v508
    %v531 = vpop.permute.xlu0 %530
    %534 = vset.pattern.permute.xlu0 0
    %535 = vperm.xlu0 %534, %v509
    %v536 = vpop.permute.xlu0 %535
    %539 = vset.pattern.permute.xlu0 0
    %540 = vperm.xlu0 %539, %v510
    %v541 = vpop.permute.xlu0 %540
    %544 = vset.pattern.permute.xlu0 0
    %545 = vperm.xlu0 %544, %v511
    %v546 = vpop.permute.xlu0 %545
    %549 = vset.pattern.permute.xlu0 0
    %550 = vperm.xlu0 %549, %v512
    %v551 = vpop.permute.xlu0 %550
    %554 = vset.pattern.permute.xlu0 0
    %555 = vperm.xlu0 %554, %v513
    %v556 = vpop.permute.xlu0 %555
    %559 = vset.pattern.permute.xlu0 0
    %560 = vperm.xlu0 %559, %v514
    %v561 = vpop.permute.xlu0 %560
    %564 = vset.pattern.permute.xlu0 0
    %565 = vperm.xlu0 %564, %v515
    %v566 = vpop.permute.xlu0 %565
    %569 = vset.pattern.permute.xlu0 0
    %570 = vperm.xlu0 %569, %v516
    %v571 = vpop.permute.xlu0 %570
    %574 = vset.pattern.permute.xlu0 0
    %575 = vperm.xlu0 %574, %v517
    %v576 = vpop.permute.xlu0 %575
    %579 = vset.pattern.permute.xlu0 0
    %580 = vperm.xlu0 %579, %v518
    %v581 = vpop.permute.xlu0 %580
    %584 = vset.pattern.permute.xlu0 0
    %585 = vperm.xlu0 %584, %v519
    %v586 = vpop.permute.xlu0 %585
    %589 = vset.pattern.permute.xlu0 0
    %590 = vperm.xlu0 %589, %v520
    %v591 = vpop.permute.xlu0 %590
    %594 = vset.pattern.permute.xlu0 0
    %595 = vperm.xlu0 %594, %v521
    %v596 = vpop.permute.xlu0 %595
    %599 = vset.pattern.permute.xlu0 0
    %600 = vperm.xlu0 %599, %v522
    %v601 = vpop.permute.xlu0 %600
    %v603 = vmul.f32 %v491, %v526
    %v604 = vmul.f32 %v492, %v531
    %v605 = vmul.f32 %v493, %v536
    %v606 = vmul.f32 %v494, %v541
    %v607 = vmul.f32 %v495, %v546
    %v608 = vmul.f32 %v496, %v551
    %v609 = vmul.f32 %v497, %v556
    %v610 = vmul.f32 %v498, %v561
    %v611 = vmul.f32 %v499, %v566
    %v612 = vmul.f32 %v500, %v571
    %v613 = vmul.f32 %v501, %v576
    %v614 = vmul.f32 %v502, %v581
    %v615 = vmul.f32 %v503, %v586
    %v616 = vmul.f32 %v504, %v591
    %v617 = vmul.f32 %v505, %v596
    %v618 = vmul.f32 %v506, %v601
    %v619 = vadd.f32 %v603, %v604
    %v620 = vadd.f32 %v619, %v605
    %v621 = vadd.f32 %v620, %v606
    %v622 = vadd.f32 %v621, %v607
    %v623 = vadd.f32 %v622, %v608
    %v624 = vadd.f32 %v623, %v609
    %v625 = vadd.f32 %v624, %v610
    %v626 = vadd.f32 %v625, %v611
    %v627 = vadd.f32 %v626, %v612
    %v628 = vadd.f32 %v627, %v613
    %v629 = vadd.f32 %v628, %v614
    %v630 = vadd.f32 %v629, %v615
    %v631 = vadd.f32 %v630, %v616
    %v632 = vadd.f32 %v631, %v617
    %v633 = vadd.f32 %v632, %v618
    %v634 = vrot.slane %v633, 4
    %v635 = vadd.f32 %v633, %v634
    %v636 = vrot.slane %v635, 2
    %v637 = vadd.f32 %v635, %v636
    %v638 = vrot.slane %v637, 1
    %v639 = vadd.f32 %v637, %v638
    %s640 = sld [smem:[#allocation2]]
    %v641 = vstv %s640
    %v642 = vadd.f32 %v639, %v641
    %643 = vst [vmem:[#allocation8] sm:$0x1] %v642
    // Predicated region
    $region38: #{tpu_custom_call.1} parent=1 // pred_check
      _
    $region39: #{tpu_custom_call.1} parent=1 // pred_check_branch
      %645 = sbr.rel (0) target = $region41
    $region40: #{tpu_custom_call.1} parent=1 // pred_region
      %s647 = ssub.s32 16, 16
      %648 = vsyncadd [#allocation5], %s647
      %s650 = sshll.u32 [#allocation8], 4
      %s651 = int_to_ptr.vmem [resolvable:$true] %s650
      %653 = dma.vmem_to_hbm [thread:$0]  %s651, 16, %s7, [#allocation5]
    $region41: #{tpu_custom_call.1} parent=1 // pred_fallthru
      _
    // Predicated region
    $region42: #{tpu_custom_call.1} parent=1 // pred_check
      _
    $region43: #{tpu_custom_call.1} parent=1 // pred_check_branch
      %655 = sbr.rel (0) target = $region45
    $region44: #{tpu_custom_call.1} parent=1 // pred_region
      %656 = dma.done [#allocation5], 16
    $region45: #{tpu_custom_call.1} parent=1 // pred_fallthru
      _
    %657 = vsyncpa [#allocation4], 1
    %658 = vsyncpa [#allocation7], 1
    %659 = vsyncpa [#allocation5], 1

</llo_original>
